<compile_context>
chip_gen: v7x
topology: tpu7x:2x2x1
jax: 0.10.0
libtpu: 0.0.40
codegen_flags: <defaults>
</compile_context>

<pallas_src>
import functools

import jax
import jax.numpy as jnp
from jax.experimental import pallas as pl
from jax.experimental.pallas import tpu as pltpu

_LANES = 128
_MIB = 1024 * 1024


def _probe_kernel(x_ref, w1_ref, b1_ref, w2_ref, b2_ref, o_ref):
    # fc1: (tb, in) @ (in, hidden) -> f32 accumulation on the MXU.
    h = jnp.dot(x_ref[...], w1_ref[...], preferred_element_type=jnp.float32)
    h = h + b1_ref[...].astype(jnp.float32)      # (1, hidden) broadcasts over rows
    h = jnp.maximum(h, 0.0)                      # ReLU on the VPU, f32
    # fc2: cast activations to the weight dtype (native bf16 MXU path when the
    # weights are bf16), accumulate in f32 again.
    out = jnp.dot(h.astype(w2_ref.dtype), w2_ref[...],
                  preferred_element_type=jnp.float32)
    out = out + b2_ref[...].astype(jnp.float32)  # (1, num_classes)
    # TODO(synk): num_classes=4 < 128 lanes -> masked vst on writeback.  The
    # lane-dense fixes (transpose the problem to (C, B) or pack 32 samples per
    # 128-lane output row / fuse the loss) change the logits layout the module
    # exposes, so they are left to callers that can consume that layout.
    o_ref[...] = out.astype(o_ref.dtype)


def _pad_cols(n):
    return ((n + _LANES - 1) // _LANES) * _LANES


def _padded_bytes(rows, cols, itemsize):
    # VMEM stores (sublane, lane) tiles: the lane dim pads to 128, the sublane
    # dim to 8 for 32-bit dtypes (16 for bf16, which packs 2 rows per sublane).
    sub = 8 if itemsize >= 4 else 8 * (4 // itemsize)
    prows = ((rows + sub - 1) // sub) * sub
    return prows * _pad_cols(cols) * itemsize


def _plan(B, input_dim, hidden_dim, num_classes, x_itemsize, w_itemsize,
          block_b):
    """Pick the batch tile and a padded-shape-aware scoped-VMEM limit."""
    # Per-row VMEM footprint of the batch-tiled buffers AFTER lane padding
    # (a (tb, 32) f32 tile really occupies tb x 128 x 4 bytes in VMEM).
    per_row = (2 * _pad_cols(input_dim) * x_itemsize        # x, double-buffered
               + 2 * _pad_cols(num_classes) * 4             # out (f32), double-buffered
               + _pad_cols(hidden_dim) * 4                  # h (f32)
               + _pad_cols(hidden_dim) * w_itemsize)        # h cast for fc2

    if block_b is None:
        # ~24 MiB of batch-tiled working set: big enough to amortize the
        # ~0.35 us/step grid overhead (>= ~0.5-1 MiB of x HBM per step at these
        # feature widths), small enough that 2x headroom stays under v7x's
        # 64 MiB/TC physical VMEM.
        tb = max(512, (24 * _MIB // per_row) // 512 * 512)
    else:
        tb = max(1, block_b)

    tb = min(tb, B)
    # v7x has 2 TensorCores and the "parallel" batch axis is the only thing
    # sharding this kernel across them: keep >= 4 grid steps on big batches.
    # (No-op on single-TC v5e/v6e; skipped for small B.)
    quarter = (B // 4) // 8 * 8
    if quarter >= 1024:
        tb = min(tb, quarter)
    if tb < B:
        tb = max(8, (tb // 8) * 8)       # sublane multiple unless full-batch

    rows = tb if tb == B else ((tb + 7) // 8) * 8
    est = (per_row * rows
           + 2 * _padded_bytes(input_dim, hidden_dim, w_itemsize)    # w1 (dbl-buf)
           + 2 * _padded_bytes(1, hidden_dim, 4)                     # b1
           + 2 * _padded_bytes(hidden_dim, num_classes, w_itemsize)  # w2
           + 2 * _padded_bytes(1, num_classes, 4))                   # b2
    # 2x headroom, floored at 16 MiB, capped at 48 MiB (< v7x 64 MiB/TC).
    vmem_limit = int(min(48 * _MIB, max(16 * _MIB, 2 * est)))
    return tb, vmem_limit


@functools.partial(jax.jit, static_argnames=("block_b",))
def complex_probe_forward(x, w1, b1, w2, b2, *, block_b=None):
    """Pallas forward pass for ComplexProbe.

    x  : (B, input_dim)         float32 or bfloat16
    w1 : (input_dim, hidden)    float32 or bfloat16 (pre-transposed vs. torch)
    b1 : (1, hidden)            float32
    w2 : (hidden, num_classes)  float32 or bfloat16 (pre-transposed vs. torch)
    b2 : (1, num_classes)       float32
    returns (B, num_classes)    float32 logits
    """
    B, input_dim = x.shape
    hidden_dim = w1.shape[1]
    num_classes = w2.shape[1]

    tb, vmem_limit = _plan(B, input_dim, hidden_dim, num_classes,
                           jnp.dtype(x.dtype).itemsize,
                           jnp.dtype(w1.dtype).itemsize, block_b)
    grid = (pl.cdiv(B, tb),)

    return pl.pallas_call(
        _probe_kernel,
        out_shape=jax.ShapeDtypeStruct((B, num_classes), jnp.float32),
        grid_spec=pl.GridSpec(
            grid=grid,
            in_specs=[
                # batch-tiled activations
                pl.BlockSpec((tb, input_dim), lambda i: (i, 0)),
                # full weight / bias blocks, resident across all batch tiles
                pl.BlockSpec((input_dim, hidden_dim), lambda i: (0, 0)),
                pl.BlockSpec((1, hidden_dim), lambda i: (0, 0)),
                pl.BlockSpec((hidden_dim, num_classes), lambda i: (0, 0)),
                pl.BlockSpec((1, num_classes), lambda i: (0, 0)),
            ],
            out_specs=pl.BlockSpec((tb, num_classes), lambda i: (i, 0)),
        ),
        compiler_params=pltpu.CompilerParams(
            dimension_semantics=("parallel",),
            vmem_limit_bytes=vmem_limit),
    )(x, w1, b1, w2, b2)


def init_probe_params(key, input_dim, hidden_dim, num_classes,
                      dtype=jnp.float32):
    """Init matching nn.Linear's default U(-1/sqrt(fan_in), 1/sqrt(fan_in)).

    Weights are stored as (in, out) and cast to `dtype` once at creation time
    (use jnp.bfloat16 for the mem-bound fast path); biases stay float32.
    """
    k1, k2, k3, k4 = jax.random.split(key, 4)
    bound1 = 1.0 / jnp.sqrt(input_dim)
    bound2 = 1.0 / jnp.sqrt(hidden_dim)
    w1 = jax.random.uniform(k1, (input_dim, hidden_dim), jnp.float32,
                            -bound1, bound1).astype(dtype)
    b1 = jax.random.uniform(k2, (1, hidden_dim), jnp.float32, -bound1, bound1)
    w2 = jax.random.uniform(k3, (hidden_dim, num_classes), jnp.float32,
                            -bound2, bound2).astype(dtype)
    b2 = jax.random.uniform(k4, (1, num_classes), jnp.float32, -bound2, bound2)
    return w1, b1, w2, b2


if __name__ == "__main__":
    input_dim, hidden_dim, num_classes = 32, 64, 4
    key = jax.random.PRNGKey(0)
    kx, kp, kx2, kx3 = jax.random.split(key, 4)

    # ---- 1) small f32 sanity check (toy shape from the training script) ----
    batch = 8
    x = jax.random.normal(kx, (batch, input_dim), jnp.float32)
    w1, b1, w2, b2 = init_probe_params(kp, input_dim, hidden_dim, num_classes)
    out = jax.block_until_ready(complex_probe_forward(x, w1, b1, w2, b2))
    ref = jnp.maximum(x @ w1 + b1, 0.0) @ w2 + b2
    assert out.shape == (batch, num_classes)
    assert jnp.allclose(out, ref, atol=1e-5, rtol=1e-5)

    # ---- 2) tiled f32 run: B=4104 -> tb=1024, 5 grid steps, partial tail ----
    big_b = 4104
    xt = jax.random.normal(kx2, (big_b, input_dim), jnp.float32)
    out_t = jax.block_until_ready(complex_probe_forward(xt, w1, b1, w2, b2))
    ref_t = jnp.maximum(xt @ w1 + b1, 0.0) @ w2 + b2
    assert out_t.shape == (big_b, num_classes)
    assert jnp.allclose(out_t, ref_t, atol=1e-4, rtol=1e-4)

    # ---- 3) bf16 inputs/weights on the single-tile path (whole-batch block) --
    bb = 2048
    xb = jax.random.normal(kx3, (bb, input_dim),
                           jnp.float32).astype(jnp.bfloat16)
    w1b, b1b, w2b, b2b = init_probe_params(
        kp, input_dim, hidden_dim, num_classes, dtype=jnp.bfloat16)
    out_b = jax.block_until_ready(
        complex_probe_forward(xb, w1b, b1b, w2b, b2b))
    h_ref = jnp.maximum(
        jnp.dot(xb, w1b, preferred_element_type=jnp.float32) + b1b, 0.0)
    ref_b = jnp.dot(h_ref.astype(jnp.bfloat16), w2b,
                    preferred_element_type=jnp.float32) + b2b
    assert out_b.shape == (bb, num_classes)
    assert jnp.allclose(out_b, ref_b, atol=2e-2, rtol=2e-2)

    print("KERNEL_OK")
</pallas_src>

<mosaic_0001>
module attributes {stable_mosaic.version = 11 : i64} {
  func.func @_probe_kernel(%arg0: i32, %arg1: memref<8x32xf32, #tpu.memory_space<vmem>>, %arg2: memref<32x64xf32, #tpu.memory_space<vmem>>, %arg3: memref<1x64xf32, #tpu.memory_space<vmem>>, %arg4: memref<64x4xf32, #tpu.memory_space<vmem>>, %arg5: memref<1x4xf32, #tpu.memory_space<vmem>>, %arg6: memref<8x4xf32, #tpu.memory_space<vmem>>) attributes {dimension_semantics = [#tpu.dimension_semantics<parallel>], iteration_bounds = array<i64: 1>, scalar_prefetch = 0 : i64, scratch_operands = 0 : i64, tpu.core_type = #tpu.core_type<tc>, window_params = [{transform_indices = @transform_0, window_bounds = array<i64: 8, 32>}, {pipeline_mode = #tpu.pipeline_mode<synchronous>, transform_indices = @transform_1, window_bounds = array<i64: 32, 64>}, {pipeline_mode = #tpu.pipeline_mode<synchronous>, transform_indices = @transform_2, window_bounds = array<i64: 1, 64>}, {pipeline_mode = #tpu.pipeline_mode<synchronous>, transform_indices = @transform_3, window_bounds = array<i64: 64, 4>}, {pipeline_mode = #tpu.pipeline_mode<synchronous>, transform_indices = @transform_4, window_bounds = array<i64: 1, 4>}, {transform_indices = @transform_5, window_bounds = array<i64: 8, 4>}]} {
    %c0 = arith.constant 0 : index
    %c0_0 = arith.constant 0 : index
    %0 = vector.load %arg1[%c0, %c0_0] : memref<8x32xf32, #tpu.memory_space<vmem>>, vector<8x32xf32>
    %c0_1 = arith.constant 0 : index
    %c0_2 = arith.constant 0 : index
    %1 = vector.load %arg2[%c0_1, %c0_2] : memref<32x64xf32, #tpu.memory_space<vmem>>, vector<32x64xf32>
    %cst = arith.constant dense<0.000000e+00> : vector<8x64xf32>
    %2 = tpu.matmul %0, %1, %cst {dimension_numbers = #tpu.dot_dimension_numbers<[1], [0], [0], [1], [0, 0, 1, 1], [], []>} : vector<8x32xf32>, vector<32x64xf32>, vector<8x64xf32> -> vector<8x64xf32>
    %c0_3 = arith.constant 0 : index
    %c0_4 = arith.constant 0 : index
    %3 = vector.load %arg3[%c0_3, %c0_4] : memref<1x64xf32, #tpu.memory_space<vmem>>, vector<1x64xf32>
    %4 = vector.broadcast %3 : vector<1x64xf32> to vector<8x64xf32>
    %5 = arith.addf %2, %4 : vector<8x64xf32>
    %cst_5 = arith.constant 0.000000e+00 : f32
    %6 = vector.broadcast %cst_5 : f32 to vector<8x64xf32>
    %7 = arith.maximumf %5, %6 : vector<8x64xf32>
    %c0_6 = arith.constant 0 : index
    %c0_7 = arith.constant 0 : index
    %8 = vector.load %arg4[%c0_6, %c0_7] : memref<64x4xf32, #tpu.memory_space<vmem>>, vector<64x4xf32>
    %cst_8 = arith.constant dense<0.000000e+00> : vector<8x4xf32>
    %9 = tpu.matmul %7, %8, %cst_8 {dimension_numbers = #tpu.dot_dimension_numbers<[1], [0], [0], [1], [0, 0, 1, 1], [], []>} : vector<8x64xf32>, vector<64x4xf32>, vector<8x4xf32> -> vector<8x4xf32>
    %c0_9 = arith.constant 0 : index
    %c0_10 = arith.constant 0 : index
    %10 = vector.load %arg5[%c0_9, %c0_10] : memref<1x4xf32, #tpu.memory_space<vmem>>, vector<1x4xf32>
    %11 = vector.broadcast %10 : vector<1x4xf32> to vector<8x4xf32>
    %12 = arith.addf %9, %11 : vector<8x4xf32>
    %c0_11 = arith.constant 0 : index
    %c0_12 = arith.constant 0 : index
    %13 = vector.load %arg6[%c0_11, %c0_12] : memref<8x4xf32, #tpu.memory_space<vmem>>, vector<8x4xf32>
    tpu.vector_store %arg6[%c0_11, %c0_12], %12 {strides = array<i32>} : memref<8x4xf32, #tpu.memory_space<vmem>>, vector<8x4xf32>,
    return
  }
  func.func @transform_0(%arg0: i32) -> (i32, i32) {
    %c0_i32 = arith.constant 0 : i32
    %c0_i32_0 = arith.constant 0 : i32
    return %arg0, %c0_i32 : i32, i32
  }
  func.func @transform_1(%arg0: i32) -> (i32, i32) {
    %c0_i32 = arith.constant 0 : i32
    %c0_i32_0 = arith.constant 0 : i32
    %c0_i32_1 = arith.constant 0 : i32
    return %c0_i32, %c0_i32_0 : i32, i32
  }
  func.func @transform_2(%arg0: i32) -> (i32, i32) {
    %c0_i32 = arith.constant 0 : i32
    %c0_i32_0 = arith.constant 0 : i32
    %c0_i32_1 = arith.constant 0 : i32
    return %c0_i32, %c0_i32_0 : i32, i32
  }
  func.func @transform_3(%arg0: i32) -> (i32, i32) {
    %c0_i32 = arith.constant 0 : i32
    %c0_i32_0 = arith.constant 0 : i32
    %c0_i32_1 = arith.constant 0 : i32
    return %c0_i32, %c0_i32_0 : i32, i32
  }
  func.func @transform_4(%arg0: i32) -> (i32, i32) {
    %c0_i32 = arith.constant 0 : i32
    %c0_i32_0 = arith.constant 0 : i32
    %c0_i32_1 = arith.constant 0 : i32
    return %c0_i32, %c0_i32_0 : i32, i32
  }
  func.func @transform_5(%arg0: i32) -> (i32, i32) {
    %c0_i32 = arith.constant 0 : i32
    %c0_i32_0 = arith.constant 0 : i32
    return %arg0, %c0_i32 : i32, i32
  }
}

</mosaic_0001>

<llo_original>
// kernel: complex_probe_forward.1
$region0: #{complex_probe_forward.1}
  #allocation0 [shape = 'u32[]', space=smem, size = 0x4, offset = 0x4, fixed_abs, tag = 'smem constant byte address 0x4 - core index']
  #allocation1 [shape = 'u32[144,128]{1,0:T(1,128)}', space=vmem, size = 0x12000, scoped, tag = 'internal scratch']
  %s0 = inlined_call_operand.vmem [shape: f32[8,32], index: 0, kind: input, shape index: {}]
  %s1 = inlined_call_operand.vmem [shape: f32[32,64], index: 1, kind: input, shape index: {}]
  %s2 = inlined_call_operand.vmem [shape: f32[1,64], index: 2, kind: input, shape index: {}]
  %s3 = inlined_call_operand.vmem [shape: f32[64,4], index: 3, kind: input, shape index: {}]
  %s4 = inlined_call_operand.vmem [shape: f32[1,4], index: 4, kind: input, shape index: {}]
  %s5 = inlined_call_operand.vmem [shape: f32[8,4], index: 5, kind: output, shape index: {}]
  %s6 = sld [smem:[#allocation0]]
  $region30: #{complex_probe_forward.1} parent=0
    _
  %s8 = ssub.s32 1, %s6
  %s9 = scalar_select 0, %s8, %s6
  // Predicated region
  $region2: #{complex_probe_forward.1} parent=0 // pred_check
    _
  $region3: #{complex_probe_forward.1} parent=0 // pred_check_branch
    %11 = sbr.rel (0) target = $region5
  $region4: #{complex_probe_forward.1} parent=0 // pred_region
    _
  $region5: #{complex_probe_forward.1} parent=0 // pred_fallthru
    _
  // Predicated region
  $region6: #{complex_probe_forward.1} parent=0 // pred_check
    _
  $region7: #{complex_probe_forward.1} parent=0 // pred_check_branch
    %13 = sbr.rel (0) target = $region9
  $region8: #{complex_probe_forward.1} parent=0 // pred_region
    _
  $region9: #{complex_probe_forward.1} parent=0 // pred_fallthru
    _
  // Predicated region
  $region10: #{complex_probe_forward.1} parent=0 // pred_check
    _
  $region11: #{complex_probe_forward.1} parent=0 // pred_check_branch
    %15 = sbr.rel (0) target = $region13
  $region12: #{complex_probe_forward.1} parent=0 // pred_region
    _
  $region13: #{complex_probe_forward.1} parent=0 // pred_fallthru
    _
  // Predicated region
  $region14: #{complex_probe_forward.1} parent=0 // pred_check
    _
  $region15: #{complex_probe_forward.1} parent=0 // pred_check_branch
    %17 = sbr.rel (0) target = $region17
  $region16: #{complex_probe_forward.1} parent=0 // pred_region
    _
  $region17: #{complex_probe_forward.1} parent=0 // pred_fallthru
    _
  // Predicated region
  $region18: #{complex_probe_forward.1} parent=0 // pred_check
    _
  $region19: #{complex_probe_forward.1} parent=0 // pred_check_branch
    %19 = sbr.rel (0) target = $region21
  $region20: #{complex_probe_forward.1} parent=0 // pred_region
    _
  $region21: #{complex_probe_forward.1} parent=0 // pred_fallthru
    _
  %v20 = vld [vmem:[%s0] sm:$0xff]
  %v21 = vld [vmem:[%s1] sm:$0xff]
  %v22 = vld [vmem:[%s1 + $0x8] sm:$0xff]
  %v23 = vld [vmem:[%s1 + $0x10] sm:$0xff]
  %v24 = vld [vmem:[%s1 + $0x18] sm:$0xff]
  %v25 = vld [vmem:[%s2] sm:$0x1]
  %v27 = vlaneseq
  %v28 = vshrl.u32 %v27, 7
  %v29 = vsub.s32 0, %v28
  %v30 = vrot.slane %v25, %v29
  %vm32 = vcmask 261120
  %v34 = vsel %vm32, %v20, 0
  %36 = vmatprep.subr.mxu0 0.0
  %37 = vmatpush1.msra.mxu0 %v21
  %38 = vmatprep.subr.mxu0 0.0
  %39 = vmatpush1.msra.mxu0 %v22
  %40 = vmatprep.subr.mxu0 0.0
  %41 = vmatpush1.msra.mxu0 %v23
  %42 = vmatprep.subr.mxu0 0.0
  %43 = vmatpush1.msra.mxu0 %v24
  %44 = vmatprep.subr.mxu0 0.0
  %45 = vmatpush1.msra.mxu0 0.0
  %46 = vmatprep.subr.mxu0 0.0
  %47 = vmatpush1.msra.mxu0 0.0
  %48 = vmatprep.subr.mxu0 0.0
  %49 = vmatpush1.msra.mxu0 0.0
  %50 = vmatprep.subr.mxu0 0.0
  %51 = vmatpush1.msra.mxu0 0.0
  %52 = vmatprep.subr.mxu0 0.0
  %53 = vmatpush1.msra.mxu0 0.0
  %54 = vmatprep.subr.mxu0 0.0
  %55 = vmatpush1.msra.mxu0 0.0
  %56 = vmatprep.subr.mxu0 0.0
  %57 = vmatpush1.msra.mxu0 0.0
  %58 = vmatprep.subr.mxu0 0.0
  %59 = vmatpush1.msra.mxu0 0.0
  %60 = vmatprep.subr.mxu0 0.0
  %61 = vmatpush1.msra.mxu0 0.0
  %62 = vmatprep.subr.mxu0 0.0
  %63 = vmatpush1.msra.mxu0 0.0
  %64 = vmatprep.subr.mxu0 0.0
  %65 = vmatpush1.msra.mxu0 0.0
  %66 = vmatprep.subr.mxu0 0.0
  %67 = vmatpush1.msra.mxu0 0.0
  %68 = vmatprep.subr.mxu0 0.0
  %69 = vmatpush1.msra.mxu0 0.0
  %70 = vmatprep.subr.mxu0 0.0
  %71 = vmatpush1.msra.mxu0 0.0
  %72 = vmatprep.subr.mxu0 0.0
  %73 = vmatpush1.msra.mxu0 0.0
  %74 = vmatprep.subr.mxu0 0.0
  %75 = vmatpush1.msra.mxu0 0.0
  %76 = vmatprep.subr.mxu0 0.0
  %77 = vmatpush1.msra.mxu0 0.0
  %78 = vmatprep.subr.mxu0 0.0
  %79 = vmatpush1.msra.mxu0 0.0
  %80 = vmatprep.subr.mxu0 0.0
  %81 = vmatpush1.msra.mxu0 0.0
  %82 = vmatprep.subr.mxu0 0.0
  %83 = vmatpush1.msra.mxu0 0.0
  %84 = vmatprep.subr.mxu0 0.0
  %85 = vmatpush1.msra.mxu0 0.0
  %86 = vmatprep.subr.mxu0 0.0
  %87 = vmatpush1.msra.mxu0 0.0
  %88 = vmatprep.subr.mxu0 0.0
  %89 = vmatpush1.msra.mxu0 0.0
  %90 = vmatprep.subr.mxu0 0.0
  %91 = vmatpush1.msra.mxu0 0.0
  %92 = vmatprep.subr.mxu0 0.0
  %93 = vmatpush1.msra.mxu0 0.0
  %94 = vmatprep.subr.mxu0 0.0
  %95 = vmatpush1.msra.mxu0 0.0
  %96 = vmatprep.subr.mxu0 0.0
  %97 = vmatpush1.msra.mxu0 0.0
  %98 = vmatprep.subr.mxu0 0.0
  %99 = vmatpush1.msra.mxu0 0.0
  %100 = vmatprep.mubr.f32.mxu0 0.0
  %101 = vmatmul.mubr.f32.gmra.mrb[0].mxu0 %v34
  %v102 = vpop.f32.mrb[0].mxu0
  %v103 = vadd.f32 %v30, %v102
  %v104 = vpop.f32.mrb[0].mxu0
  %105 = vdwg.mxu0
  %v106 = vmax.f32 %v103, 0.0
  %v107 = vld [vmem:[%s3] sm:$0xff]
  %v108 = vld [vmem:[%s3 + $0x8] sm:$0xff]
  %v109 = vld [vmem:[%s3 + $0x10] sm:$0xff]
  %v110 = vld [vmem:[%s3 + $0x18] sm:$0xff]
  %v111 = vld [vmem:[%s3 + $0x20] sm:$0xff]
  %v112 = vld [vmem:[%s3 + $0x28] sm:$0xff]
  %v113 = vld [vmem:[%s3 + $0x30] sm:$0xff]
  %v114 = vld [vmem:[%s3 + $0x38] sm:$0xff]
  %v115 = vld [vmem:[%s4] sm:$0x1]
  %v117 = vlaneseq
  %v118 = vshrl.u32 %v117, 7
  %v119 = vsub.s32 0, %v118
  %v120 = vrot.slane %v115, %v119
  %vm122 = vcmask 523264
  %v124 = vsel %vm122, %v106, 0
  %126 = vmatprep.subr.mxu0 0.0
  %127 = vmatpush1.msra.mxu0 %v107
  %128 = vmatprep.subr.mxu0 0.0
  %129 = vmatpush1.msra.mxu0 %v108
  %130 = vmatprep.subr.mxu0 0.0
  %131 = vmatpush1.msra.mxu0 %v109
  %132 = vmatprep.subr.mxu0 0.0
  %133 = vmatpush1.msra.mxu0 %v110
  %134 = vmatprep.subr.mxu0 0.0
  %135 = vmatpush1.msra.mxu0 %v111
  %136 = vmatprep.subr.mxu0 0.0
  %137 = vmatpush1.msra.mxu0 %v112
  %138 = vmatprep.subr.mxu0 0.0
  %139 = vmatpush1.msra.mxu0 %v113
  %140 = vmatprep.subr.mxu0 0.0
  %141 = vmatpush1.msra.mxu0 %v114
  %142 = vmatprep.subr.mxu0 0.0
  %143 = vmatpush1.msra.mxu0 0.0
  %144 = vmatprep.subr.mxu0 0.0
  %145 = vmatpush1.msra.mxu0 0.0
  %146 = vmatprep.subr.mxu0 0.0
  %147 = vmatpush1.msra.mxu0 0.0
  %148 = vmatprep.subr.mxu0 0.0
  %149 = vmatpush1.msra.mxu0 0.0
  %150 = vmatprep.subr.mxu0 0.0
  %151 = vmatpush1.msra.mxu0 0.0
  %152 = vmatprep.subr.mxu0 0.0
  %153 = vmatpush1.msra.mxu0 0.0
  %154 = vmatprep.subr.mxu0 0.0
  %155 = vmatpush1.msra.mxu0 0.0
  %156 = vmatprep.subr.mxu0 0.0
  %157 = vmatpush1.msra.mxu0 0.0
  %158 = vmatprep.subr.mxu0 0.0
  %159 = vmatpush1.msra.mxu0 0.0
  %160 = vmatprep.subr.mxu0 0.0
  %161 = vmatpush1.msra.mxu0 0.0
  %162 = vmatprep.subr.mxu0 0.0
  %163 = vmatpush1.msra.mxu0 0.0
  %164 = vmatprep.subr.mxu0 0.0
  %165 = vmatpush1.msra.mxu0 0.0
  %166 = vmatprep.subr.mxu0 0.0
  %167 = vmatpush1.msra.mxu0 0.0
  %168 = vmatprep.subr.mxu0 0.0
  %169 = vmatpush1.msra.mxu0 0.0
  %170 = vmatprep.subr.mxu0 0.0
  %171 = vmatpush1.msra.mxu0 0.0
  %172 = vmatprep.subr.mxu0 0.0
  %173 = vmatpush1.msra.mxu0 0.0
  %174 = vmatprep.subr.mxu0 0.0
  %175 = vmatpush1.msra.mxu0 0.0
  %176 = vmatprep.subr.mxu0 0.0
  %177 = vmatpush1.msra.mxu0 0.0
  %178 = vmatprep.subr.mxu0 0.0
  %179 = vmatpush1.msra.mxu0 0.0
  %180 = vmatprep.subr.mxu0 0.0
  %181 = vmatpush1.msra.mxu0 0.0
  %182 = vmatprep.subr.mxu0 0.0
  %183 = vmatpush1.msra.mxu0 0.0
  %184 = vmatprep.subr.mxu0 0.0
  %185 = vmatpush1.msra.mxu0 0.0
  %186 = vmatprep.subr.mxu0 0.0
  %187 = vmatpush1.msra.mxu0 0.0
  %188 = vmatprep.subr.mxu0 0.0
  %189 = vmatpush1.msra.mxu0 0.0
  %190 = vmatprep.mubr.f32.mxu0 0.0
  %191 = vmatmul.mubr.f32.gmra.mrb[0].mxu0 %v124
  %v192 = vpop.f32.mrb[0].mxu0
  %v193 = vadd.f32 %v120, %v192
  %v194 = vpop.f32.mrb[0].mxu0
  %195 = vdwg.mxu0
  %vm196 = vcmask 31744
  %197 = vst.msk [vmem:[%s5] sm:$0xff] %vm196, %v193
  // Predicated region
  $region22: #{complex_probe_forward.1} parent=0 // pred_check
    _
  $region23: #{complex_probe_forward.1} parent=0 // pred_check_branch
    %199 = sbr.rel (0) target = $region25
  $region24: #{complex_probe_forward.1} parent=0 // pred_region
    _
  $region25: #{complex_probe_forward.1} parent=0 // pred_fallthru
    _
  // Predicated region
  $region26: #{complex_probe_forward.1} parent=0 // pred_check
    _
  $region27: #{complex_probe_forward.1} parent=0 // pred_check_branch
    %201 = sbr.rel (0) target = $region29
  $region28: #{complex_probe_forward.1} parent=0 // pred_region
    _
  $region29: #{complex_probe_forward.1} parent=0 // pred_fallthru
    _

</llo_original>
